<compile_context>
chip_gen: v7x
topology: tpu7x:2x2x1
jax: 0.10.0
libtpu: 0.0.40
codegen_flags: <defaults>
</compile_context>

<pallas_src>
import functools

import jax
import jax.numpy as jnp
from jax.experimental import pallas as pl
from jax.experimental.pallas import tpu as pltpu

FEAT_DIM = 512
HID_DIM = FEAT_DIM // 2      # 256
OUT_DIM = 36
OUT_PAD = 128                # lane-dense output width (>= OUT_DIM, multiple of 128)
BN_EPS = 1e-5


def _round_up(n, m):
    return (n + m - 1) // m * m


# ---------------------------------------------------------------------------
# Kernel 1: per-feature sum and sum-of-squares of h = x @ W1 over the batch.
# Output blocks have a constant index_map -> VMEM-resident accumulators (P3).
# ---------------------------------------------------------------------------
def _stats_kernel(x_ref, w1_ref, sum_ref, sumsq_ref):
    @pl.when(pl.program_id(0) == 0)
    def _():
        sum_ref[...] = jnp.zeros_like(sum_ref)
        sumsq_ref[...] = jnp.zeros_like(sumsq_ref)

    h = jnp.dot(x_ref[...], w1_ref[...], preferred_element_type=jnp.float32)
    sum_ref[...] += jnp.sum(h, axis=0, keepdims=True)
    sumsq_ref[...] += jnp.sum(h * h, axis=0, keepdims=True)


# ---------------------------------------------------------------------------
# Kernel 2: h = x @ W1 ; folded BN (h*scale + shift) ; ReLU ; @ W2_pad + b2_pad
# ---------------------------------------------------------------------------
def _fwd_kernel(x_ref, w1_ref, scale_ref, shift_ref, w2_ref, b2_ref, o_ref):
    h = jnp.dot(x_ref[...], w1_ref[...], preferred_element_type=jnp.float32)
    hr = jnp.maximum(h * scale_ref[...] + shift_ref[...], 0.0)
    o_ref[...] = (jnp.dot(hr.astype(jnp.bfloat16), w2_ref[...],
                          preferred_element_type=jnp.float32) + b2_ref[...])


@functools.partial(jax.jit, static_argnames=("tile_b",))
def alpha_classifier(x, w1, b1, gamma, beta, w2, b2, *, tile_b=256):
    """AlphaClassifier forward pass (training-mode BatchNorm batch statistics).

    `b1` is accepted for parameter parity with the PyTorch module, but it is
    mathematically cancelled by the BatchNorm mean subtraction, so it is not
    fed to the kernels (exact same output).
    """
    del b1  # cancelled exactly by BN mean subtraction
    B = x.shape[0]

    # Batch tiling: pad the batch with zero rows to a bf16-friendly tile multiple.
    tb = min(tile_b, _round_up(B, 16))
    Bp = _round_up(B, tb)
    nb = Bp // tb

    x_bf = x.astype(jnp.bfloat16)
    if Bp != B:
        x_bf = jnp.pad(x_bf, ((0, Bp - B), (0, 0)))
    w1_bf = w1.astype(jnp.bfloat16)

    vmem_limit = 32 * 1024 * 1024  # generous; actual footprint is a few MiB

    # ---- phase 1: batch statistics of h = x @ W1 -----------------------------
    stats_cost = pl.CostEstimate(
        flops=2 * Bp * FEAT_DIM * HID_DIM,
        transcendentals=0,
        bytes_accessed=x_bf.size * 2 + w1_bf.size * 2 + 2 * HID_DIM * 4,
    )
    h_sum, h_sumsq = pl.pallas_call(
        _stats_kernel,
        out_shape=(jax.ShapeDtypeStruct((1, HID_DIM), jnp.float32),
                   jax.ShapeDtypeStruct((1, HID_DIM), jnp.float32)),
        grid_spec=pltpu.PrefetchScalarGridSpec(
            num_scalar_prefetch=0,
            grid=(nb,),
            in_specs=[pl.BlockSpec((tb, FEAT_DIM), lambda i: (i, 0)),
                      pl.BlockSpec((FEAT_DIM, HID_DIM), lambda i: (0, 0))],
            out_specs=[pl.BlockSpec((1, HID_DIM), lambda i: (0, 0)),
                       pl.BlockSpec((1, HID_DIM), lambda i: (0, 0))]),
        compiler_params=pltpu.CompilerParams(
            dimension_semantics=("arbitrary",),
            vmem_limit_bytes=vmem_limit),
        cost_estimate=stats_cost,
    )(x_bf, w1_bf)

    # Padded rows contribute exactly zero to sum/sumsq (no pre-BN bias), so the
    # true-B division below yields the exact biased batch statistics.
    mean = h_sum / B
    var = jnp.maximum(h_sumsq / B - mean * mean, 0.0)
    scale = gamma * jax.lax.rsqrt(var + BN_EPS)        # (1, 256) f32
    shift = beta - mean * scale                        # (1, 256) f32

    # Lane-dense second layer: pad the 36 output columns up to 128.
    w2_pad = jnp.pad(w2.astype(jnp.bfloat16), ((0, 0), (0, OUT_PAD - OUT_DIM)))
    b2_pad = jnp.pad(b2, ((0, 0), (0, OUT_PAD - OUT_DIM)))

    # ---- phase 2: normalize + ReLU + second matmul ----------------------------
    fwd_cost = pl.CostEstimate(
        flops=2 * Bp * FEAT_DIM * HID_DIM + 2 * Bp * HID_DIM * OUT_PAD,
        transcendentals=0,
        bytes_accessed=(x_bf.size * 2 + w1_bf.size * 2 + w2_pad.size * 2
                        + Bp * OUT_PAD * 4),
    )
    out_pad = pl.pallas_call(
        _fwd_kernel,
        out_shape=jax.ShapeDtypeStruct((Bp, OUT_PAD), jnp.float32),
        grid_spec=pltpu.PrefetchScalarGridSpec(
            num_scalar_prefetch=0,
            grid=(nb,),
            in_specs=[pl.BlockSpec((tb, FEAT_DIM), lambda i: (i, 0)),
                      pl.BlockSpec((FEAT_DIM, HID_DIM), lambda i: (0, 0)),
                      pl.BlockSpec((1, HID_DIM), lambda i: (0, 0)),
                      pl.BlockSpec((1, HID_DIM), lambda i: (0, 0)),
                      pl.BlockSpec((HID_DIM, OUT_PAD), lambda i: (0, 0)),
                      pl.BlockSpec((1, OUT_PAD), lambda i: (0, 0))],
            out_specs=pl.BlockSpec((tb, OUT_PAD), lambda i: (i, 0))),
        compiler_params=pltpu.CompilerParams(
            dimension_semantics=("parallel",),
            vmem_limit_bytes=vmem_limit),
        cost_estimate=fwd_cost,
    )(x_bf, w1_bf, scale, shift, w2_pad, b2_pad)

    return out_pad[:B, :OUT_DIM]


def init_params(key):
    """Deterministic init mimicking PyTorch defaults (uniform +/- 1/sqrt(fan_in))."""
    k1, k2, k3, k4 = jax.random.split(key, 4)
    bound1 = 1.0 / (FEAT_DIM ** 0.5)
    bound2 = 1.0 / (HID_DIM ** 0.5)
    # Linear weights stored pre-transposed: (in_features, out_features)
    w1 = jax.random.uniform(k1, (FEAT_DIM, HID_DIM), jnp.float32, -bound1, bound1)
    b1 = jax.random.uniform(k2, (1, HID_DIM), jnp.float32, -bound1, bound1)
    gamma = jnp.ones((1, HID_DIM), jnp.float32)   # BatchNorm1d weight init
    beta = jnp.zeros((1, HID_DIM), jnp.float32)   # BatchNorm1d bias init
    w2 = jax.random.uniform(k3, (HID_DIM, OUT_DIM), jnp.float32, -bound2, bound2)
    b2 = jax.random.uniform(k4, (1, OUT_DIM), jnp.float32, -bound2, bound2)
    return w1, b1, gamma, beta, w2, b2


def reference(x, w1, b1, gamma, beta, w2, b2):
    """Exact f32 reference matching the PyTorch module (training-mode BN, biased var)."""
    h = x @ w1 + b1
    mean = jnp.mean(h, axis=0, keepdims=True)
    var = jnp.mean((h - mean) ** 2, axis=0, keepdims=True)
    hn = (h - mean) / jnp.sqrt(var + BN_EPS) * gamma + beta
    return jnp.maximum(hn, 0.0) @ w2 + b2


if __name__ == "__main__":
    key = jax.random.PRNGKey(0)
    k_params, k_x1, k_x2 = jax.random.split(key, 3)
    params = init_params(k_params)

    # Primary small check: B=8 (single batch tile).
    x = jax.random.normal(k_x1, (8, FEAT_DIM), jnp.float32)
    out = jax.block_until_ready(alpha_classifier(x, *params))
    ref = reference(x, *params)
    assert out.shape == (8, OUT_DIM)
    assert jnp.allclose(out, ref, atol=2e-2, rtol=2e-2), \
        float(jnp.max(jnp.abs(out - ref)))

    # Multi-tile check: B=40 with tile_b=16 -> 3 batch tiles + 8 zero-padded rows
    # (exercises the two-phase reduction grid and the batch padding path).
    x2 = jax.random.normal(k_x2, (40, FEAT_DIM), jnp.float32)
    out2 = jax.block_until_ready(alpha_classifier(x2, *params, tile_b=16))
    ref2 = reference(x2, *params)
    assert out2.shape == (40, OUT_DIM)
    assert jnp.allclose(out2, ref2, atol=2e-2, rtol=2e-2), \
        float(jnp.max(jnp.abs(out2 - ref2)))

    print("KERNEL_OK")
</pallas_src>

<mosaic_0001>
module attributes {stable_mosaic.version = 11 : i64} {
  func.func @_stats_kernel(%arg0: i32, %arg1: memref<16x512xbf16, #tpu.memory_space<vmem>>, %arg2: memref<512x256xbf16, #tpu.memory_space<vmem>>, %arg3: memref<1x256xf32, #tpu.memory_space<vmem>>, %arg4: memref<1x256xf32, #tpu.memory_space<vmem>>) attributes {dimension_semantics = [#tpu.dimension_semantics<arbitrary>], iteration_bounds = array<i64: 1>, scalar_prefetch = 0 : i64, scratch_operands = 0 : i64, tpu.core_type = #tpu.core_type<tc>, window_params = [{transform_indices = @transform_0, window_bounds = array<i64: 16, 512>}, {pipeline_mode = #tpu.pipeline_mode<synchronous>, transform_indices = @transform_1, window_bounds = array<i64: 512, 256>}, {pipeline_mode = #tpu.pipeline_mode<synchronous>, transform_indices = @transform_2, window_bounds = array<i64: 1, 256>}, {pipeline_mode = #tpu.pipeline_mode<synchronous>, transform_indices = @transform_3, window_bounds = array<i64: 1, 256>}]} {
    %c0_i32 = arith.constant 0 : i32
    %0 = arith.cmpi eq, %arg0, %c0_i32 : i32
    %1 = arith.extui %0 : i1 to i32
    %c0_i32_0 = arith.constant 0 : i32
    %2 = arith.cmpi ne, %1, %c0_i32_0 : i32
    scf.if %2 {
      %cst_14 = arith.constant 0.000000e+00 : f32
      %17 = vector.broadcast %cst_14 : f32 to vector<1x256xf32>
      %c0_15 = arith.constant 0 : index
      %c0_16 = arith.constant 0 : index
      %18 = vector.load %arg3[%c0_15, %c0_16] : memref<1x256xf32, #tpu.memory_space<vmem>>, vector<1x256xf32>
      tpu.vector_store %arg3[%c0_15, %c0_16], %17 {strides = array<i32>} : memref<1x256xf32, #tpu.memory_space<vmem>>, vector<1x256xf32>,
      %cst_17 = arith.constant 0.000000e+00 : f32
      %19 = vector.broadcast %cst_17 : f32 to vector<1x256xf32>
      %c0_18 = arith.constant 0 : index
      %c0_19 = arith.constant 0 : index
      %20 = vector.load %arg4[%c0_18, %c0_19] : memref<1x256xf32, #tpu.memory_space<vmem>>, vector<1x256xf32>
      tpu.vector_store %arg4[%c0_18, %c0_19], %19 {strides = array<i32>} : memref<1x256xf32, #tpu.memory_space<vmem>>, vector<1x256xf32>,
    } else {
    }
    %c0 = arith.constant 0 : index
    %c0_1 = arith.constant 0 : index
    %3 = vector.load %arg1[%c0, %c0_1] : memref<16x512xbf16, #tpu.memory_space<vmem>>, vector<16x512xbf16>
    %c0_2 = arith.constant 0 : index
    %c0_3 = arith.constant 0 : index
    %4 = vector.load %arg2[%c0_2, %c0_3] : memref<512x256xbf16, #tpu.memory_space<vmem>>, vector<512x256xbf16>
    %cst = arith.constant dense<0.000000e+00> : vector<16x256xf32>
    %5 = tpu.matmul %3, %4, %cst {dimension_numbers = #tpu.dot_dimension_numbers<[1], [0], [0], [1], [0, 0, 1, 1], [], []>} : vector<16x512xbf16>, vector<512x256xbf16>, vector<16x256xf32> -> vector<16x256xf32>
    %c0_4 = arith.constant 0 : index
    %c0_5 = arith.constant 0 : index
    %6 = vector.load %arg3[%c0_4, %c0_5] : memref<1x256xf32, #tpu.memory_space<vmem>>, vector<1x256xf32>
    %cst_6 = arith.constant dense<0.000000e+00> : vector<256xf32>
    %7 = vector.multi_reduction <add>, %5, %cst_6 [0] : vector<16x256xf32> to vector<256xf32>
    %8 = vector.shape_cast %7 : vector<256xf32> to vector<1x256xf32>
    %9 = arith.addf %6, %8 : vector<1x256xf32>
    %c0_7 = arith.constant 0 : index
    %c0_8 = arith.constant 0 : index
    %10 = vector.load %arg3[%c0_7, %c0_8] : memref<1x256xf32, #tpu.memory_space<vmem>>, vector<1x256xf32>
    tpu.vector_store %arg3[%c0_7, %c0_8], %9 {strides = array<i32>} : memref<1x256xf32, #tpu.memory_space<vmem>>, vector<1x256xf32>,
    %c0_9 = arith.constant 0 : index
    %c0_10 = arith.constant 0 : index
    %11 = vector.load %arg4[%c0_9, %c0_10] : memref<1x256xf32, #tpu.memory_space<vmem>>, vector<1x256xf32>
    %12 = arith.mulf %5, %5 : vector<16x256xf32>
    %cst_11 = arith.constant dense<0.000000e+00> : vector<256xf32>
    %13 = vector.multi_reduction <add>, %12, %cst_11 [0] : vector<16x256xf32> to vector<256xf32>
    %14 = vector.shape_cast %13 : vector<256xf32> to vector<1x256xf32>
    %15 = arith.addf %11, %14 : vector<1x256xf32>
    %c0_12 = arith.constant 0 : index
    %c0_13 = arith.constant 0 : index
    %16 = vector.load %arg4[%c0_12, %c0_13] : memref<1x256xf32, #tpu.memory_space<vmem>>, vector<1x256xf32>
    tpu.vector_store %arg4[%c0_12, %c0_13], %15 {strides = array<i32>} : memref<1x256xf32, #tpu.memory_space<vmem>>, vector<1x256xf32>,
    return
  }
  func.func @transform_0(%arg0: i32) -> (i32, i32) {
    %c0_i32 = arith.constant 0 : i32
    %c0_i32_0 = arith.constant 0 : i32
    return %arg0, %c0_i32 : i32, i32
  }
  func.func @transform_1(%arg0: i32) -> (i32, i32) {
    %c0_i32 = arith.constant 0 : i32
    %c0_i32_0 = arith.constant 0 : i32
    %c0_i32_1 = arith.constant 0 : i32
    return %c0_i32, %c0_i32_0 : i32, i32
  }
  func.func @transform_2(%arg0: i32) -> (i32, i32) {
    %c0_i32 = arith.constant 0 : i32
    %c0_i32_0 = arith.constant 0 : i32
    %c0_i32_1 = arith.constant 0 : i32
    return %c0_i32, %c0_i32_0 : i32, i32
  }
  func.func @transform_3(%arg0: i32) -> (i32, i32) {
    %c0_i32 = arith.constant 0 : i32
    %c0_i32_0 = arith.constant 0 : i32
    %c0_i32_1 = arith.constant 0 : i32
    return %c0_i32, %c0_i32_0 : i32, i32
  }
}

module attributes {stable_mosaic.version = 11 : i64} {
  func.func @_fwd_kernel(%arg0: i32, %arg1: memref<16x512xbf16, #tpu.memory_space<vmem>>, %arg2: memref<512x256xbf16, #tpu.memory_space<vmem>>, %arg3: memref<1x256xf32, #tpu.memory_space<vmem>>, %arg4: memref<1x256xf32, #tpu.memory_space<vmem>>, %arg5: memref<256x128xbf16, #tpu.memory_space<vmem>>, %arg6: memref<1x128xf32, #tpu.memory_space<vmem>>, %arg7: memref<16x128xf32, #tpu.memory_space<vmem>>) attributes {dimension_semantics = [#tpu.dimension_semantics<parallel>], iteration_bounds = array<i64: 1>, scalar_prefetch = 0 : i64, scratch_operands = 0 : i64, tpu.core_type = #tpu.core_type<tc>, window_params = [{transform_indices = @transform_0, window_bounds = array<i64: 16, 512>}, {pipeline_mode = #tpu.pipeline_mode<synchronous>, transform_indices = @transform_1, window_bounds = array<i64: 512, 256>}, {pipeline_mode = #tpu.pipeline_mode<synchronous>, transform_indices = @transform_2, window_bounds = array<i64: 1, 256>}, {pipeline_mode = #tpu.pipeline_mode<synchronous>, transform_indices = @transform_3, window_bounds = array<i64: 1, 256>}, {pipeline_mode = #tpu.pipeline_mode<synchronous>, transform_indices = @transform_4, window_bounds = array<i64: 256, 128>}, {pipeline_mode = #tpu.pipeline_mode<synchronous>, transform_indices = @transform_5, window_bounds = array<i64: 1, 128>}, {transform_indices = @transform_6, window_bounds = array<i64: 16, 128>}]} {
    %c0 = arith.constant 0 : index
    %c0_0 = arith.constant 0 : index
    %0 = vector.load %arg1[%c0, %c0_0] : memref<16x512xbf16, #tpu.memory_space<vmem>>, vector<16x512xbf16>
    %c0_1 = arith.constant 0 : index
    %c0_2 = arith.constant 0 : index
    %1 = vector.load %arg2[%c0_1, %c0_2] : memref<512x256xbf16, #tpu.memory_space<vmem>>, vector<512x256xbf16>
    %cst = arith.constant dense<0.000000e+00> : vector<16x256xf32>
    %2 = tpu.matmul %0, %1, %cst {dimension_numbers = #tpu.dot_dimension_numbers<[1], [0], [0], [1], [0, 0, 1, 1], [], []>} : vector<16x512xbf16>, vector<512x256xbf16>, vector<16x256xf32> -> vector<16x256xf32>
    %c0_3 = arith.constant 0 : index
    %c0_4 = arith.constant 0 : index
    %3 = vector.load %arg3[%c0_3, %c0_4] : memref<1x256xf32, #tpu.memory_space<vmem>>, vector<1x256xf32>
    %4 = vector.broadcast %3 : vector<1x256xf32> to vector<16x256xf32>
    %5 = arith.mulf %2, %4 : vector<16x256xf32>
    %c0_5 = arith.constant 0 : index
    %c0_6 = arith.constant 0 : index
    %6 = vector.load %arg4[%c0_5, %c0_6] : memref<1x256xf32, #tpu.memory_space<vmem>>, vector<1x256xf32>
    %7 = vector.broadcast %6 : vector<1x256xf32> to vector<16x256xf32>
    %8 = arith.addf %5, %7 : vector<16x256xf32>
    %cst_7 = arith.constant 0.000000e+00 : f32
    %9 = vector.broadcast %cst_7 : f32 to vector<16x256xf32>
    %10 = arith.maximumf %8, %9 : vector<16x256xf32>
    %11 = arith.truncf %10 : vector<16x256xf32> to vector<16x256xbf16>
    %c0_8 = arith.constant 0 : index
    %c0_9 = arith.constant 0 : index
    %12 = vector.load %arg5[%c0_8, %c0_9] : memref<256x128xbf16, #tpu.memory_space<vmem>>, vector<256x128xbf16>
    %cst_10 = arith.constant dense<0.000000e+00> : vector<16x128xf32>
    %13 = tpu.matmul %11, %12, %cst_10 {dimension_numbers = #tpu.dot_dimension_numbers<[1], [0], [0], [1], [0, 0, 1, 1], [], []>} : vector<16x256xbf16>, vector<256x128xbf16>, vector<16x128xf32> -> vector<16x128xf32>
    %c0_11 = arith.constant 0 : index
    %c0_12 = arith.constant 0 : index
    %14 = vector.load %arg6[%c0_11, %c0_12] : memref<1x128xf32, #tpu.memory_space<vmem>>, vector<1x128xf32>
    %15 = vector.broadcast %14 : vector<1x128xf32> to vector<16x128xf32>
    %16 = arith.addf %13, %15 : vector<16x128xf32>
    %c0_13 = arith.constant 0 : index
    %c0_14 = arith.constant 0 : index
    %17 = vector.load %arg7[%c0_13, %c0_14] : memref<16x128xf32, #tpu.memory_space<vmem>>, vector<16x128xf32>
    tpu.vector_store %arg7[%c0_13, %c0_14], %16 {strides = array<i32>} : memref<16x128xf32, #tpu.memory_space<vmem>>, vector<16x128xf32>,
    return
  }
  func.func @transform_0(%arg0: i32) -> (i32, i32) {
    %c0_i32 = arith.constant 0 : i32
    %c0_i32_0 = arith.constant 0 : i32
    return %arg0, %c0_i32 : i32, i32
  }
  func.func @transform_1(%arg0: i32) -> (i32, i32) {
    %c0_i32 = arith.constant 0 : i32
    %c0_i32_0 = arith.constant 0 : i32
    %c0_i32_1 = arith.constant 0 : i32
    return %c0_i32, %c0_i32_0 : i32, i32
  }
  func.func @transform_2(%arg0: i32) -> (i32, i32) {
    %c0_i32 = arith.constant 0 : i32
    %c0_i32_0 = arith.constant 0 : i32
    %c0_i32_1 = arith.constant 0 : i32
    return %c0_i32, %c0_i32_0 : i32, i32
  }
  func.func @transform_3(%arg0: i32) -> (i32, i32) {
    %c0_i32 = arith.constant 0 : i32
    %c0_i32_0 = arith.constant 0 : i32
    %c0_i32_1 = arith.constant 0 : i32
    return %c0_i32, %c0_i32_0 : i32, i32
  }
  func.func @transform_4(%arg0: i32) -> (i32, i32) {
    %c0_i32 = arith.constant 0 : i32
    %c0_i32_0 = arith.constant 0 : i32
    %c0_i32_1 = arith.constant 0 : i32
    return %c0_i32, %c0_i32_0 : i32, i32
  }
  func.func @transform_5(%arg0: i32) -> (i32, i32) {
    %c0_i32 = arith.constant 0 : i32
    %c0_i32_0 = arith.constant 0 : i32
    %c0_i32_1 = arith.constant 0 : i32
    return %c0_i32, %c0_i32_0 : i32, i32
  }
  func.func @transform_6(%arg0: i32) -> (i32, i32) {
    %c0_i32 = arith.constant 0 : i32
    %c0_i32_0 = arith.constant 0 : i32
    return %arg0, %c0_i32 : i32, i32
  }
}

</mosaic_0001>

<llo_original>
// kernel: alpha_classifier.2
$region0: #{alpha_classifier.2}
  #allocation0 [shape = 'u32[]', space=smem, size = 0x4, offset = 0x4, fixed_abs, tag = 'smem constant byte address 0x4 - core index']
  #allocation1 [shape = 'u32[144,128]{1,0:T(1,128)}', space=vmem, size = 0x12000, scoped, tag = 'internal scratch']
  %s0 = inlined_call_operand.vmem [shape: bf16[16,512], index: 0, kind: input, shape index: {}]
  %s1 = inlined_call_operand.vmem [shape: bf16[512,256], index: 1, kind: input, shape index: {}]
  %s2 = inlined_call_operand.vmem [shape: f32[1,256], index: 2, kind: output, shape index: {0}]
  %s3 = inlined_call_operand.vmem [shape: f32[1,256], index: 3, kind: output, shape index: {1}]
  %4 = xla_tuple %s2, %s3
  %s5 = sld [smem:[#allocation0]]
  $region30: #{alpha_classifier.2} parent=0
    _
  %s7 = ssub.s32 1, %s5
  %s8 = scalar_select 0, %s7, %s5
  // Predicated region
  $region2: #{alpha_classifier.2} parent=0 // pred_check
    _
  $region3: #{alpha_classifier.2} parent=0 // pred_check_branch
    %10 = sbr.rel (0) target = $region5
  $region4: #{alpha_classifier.2} parent=0 // pred_region
    _
  $region5: #{alpha_classifier.2} parent=0 // pred_fallthru
    _
  // Predicated region
  $region6: #{alpha_classifier.2} parent=0 // pred_check
    _
  $region7: #{alpha_classifier.2} parent=0 // pred_check_branch
    %12 = sbr.rel (0) target = $region9
  $region8: #{alpha_classifier.2} parent=0 // pred_region
    _
  $region9: #{alpha_classifier.2} parent=0 // pred_fallthru
    _
  %p13 = scmp.eq.s32.totalorder 0, 0
  // Predicated region
  $region10: #{alpha_classifier.2} parent=0 // pred_check
    %p14 = pneg %p13
  $region11: #{alpha_classifier.2} parent=0 // pred_check_branch
    %16 = sbr.rel (%p14) target = $region13
  $region12: #{alpha_classifier.2} parent=0 // pred_region
    %v17 = vlaneseq
    %vm18 = vcmp.ge.s32.totalorder %v17, 0
    %vm19 = vcmp.lt.s32.totalorder %v17, 256
    %vm20 = vmand %vm18, %vm19
    %21 = vst.msk [vmem:[%s2] sm:$0x3] %vm20, 0.0
    %22 = vst.msk [vmem:[%s3] sm:$0x3] %vm20, 0.0
  $region13: #{alpha_classifier.2} parent=0 // pred_fallthru
    _
  %v23 = vld [vmem:[%s0] sm:$0xff]
  %v24 = vld [vmem:[%s0 + $0x8] sm:$0xff]
  %v25 = vld [vmem:[%s0 + $0x10] sm:$0xff]
  %v26 = vld [vmem:[%s0 + $0x18] sm:$0xff]
  %v27 = vld [vmem:[%s1] sm:$0xff]
  %v28 = vld [vmem:[%s1 + $0x8] sm:$0xff]
  %v29 = vld [vmem:[%s1 + $0x10] sm:$0xff]
  %v30 = vld [vmem:[%s1 + $0x18] sm:$0xff]
  %v31 = vld [vmem:[%s1 + $0x20] sm:$0xff]
  %v32 = vld [vmem:[%s1 + $0x28] sm:$0xff]
  %v33 = vld [vmem:[%s1 + $0x30] sm:$0xff]
  %v34 = vld [vmem:[%s1 + $0x38] sm:$0xff]
  %v35 = vld [vmem:[%s1 + $0x40] sm:$0xff]
  %v36 = vld [vmem:[%s1 + $0x48] sm:$0xff]
  %v37 = vld [vmem:[%s1 + $0x50] sm:$0xff]
  %v38 = vld [vmem:[%s1 + $0x58] sm:$0xff]
  %v39 = vld [vmem:[%s1 + $0x60] sm:$0xff]
  %v40 = vld [vmem:[%s1 + $0x68] sm:$0xff]
  %v41 = vld [vmem:[%s1 + $0x70] sm:$0xff]
  %v42 = vld [vmem:[%s1 + $0x78] sm:$0xff]
  %v43 = vld [vmem:[%s1 + $0x80] sm:$0xff]
  %v44 = vld [vmem:[%s1 + $0x88] sm:$0xff]
  %v45 = vld [vmem:[%s1 + $0x90] sm:$0xff]
  %v46 = vld [vmem:[%s1 + $0x98] sm:$0xff]
  %v47 = vld [vmem:[%s1 + $0xa0] sm:$0xff]
  %v48 = vld [vmem:[%s1 + $0xa8] sm:$0xff]
  %v49 = vld [vmem:[%s1 + $0xb0] sm:$0xff]
  %v50 = vld [vmem:[%s1 + $0xb8] sm:$0xff]
  %v51 = vld [vmem:[%s1 + $0xc0] sm:$0xff]
  %v52 = vld [vmem:[%s1 + $0xc8] sm:$0xff]
  %v53 = vld [vmem:[%s1 + $0xd0] sm:$0xff]
  %v54 = vld [vmem:[%s1 + $0xd8] sm:$0xff]
  %v55 = vld [vmem:[%s1 + $0xe0] sm:$0xff]
  %v56 = vld [vmem:[%s1 + $0xe8] sm:$0xff]
  %v57 = vld [vmem:[%s1 + $0xf0] sm:$0xff]
  %v58 = vld [vmem:[%s1 + $0xf8] sm:$0xff]
  %v59 = vld [vmem:[%s1 + $0x100] sm:$0xff]
  %v60 = vld [vmem:[%s1 + $0x108] sm:$0xff]
  %v61 = vld [vmem:[%s1 + $0x110] sm:$0xff]
  %v62 = vld [vmem:[%s1 + $0x118] sm:$0xff]
  %v63 = vld [vmem:[%s1 + $0x120] sm:$0xff]
  %v64 = vld [vmem:[%s1 + $0x128] sm:$0xff]
  %v65 = vld [vmem:[%s1 + $0x130] sm:$0xff]
  %v66 = vld [vmem:[%s1 + $0x138] sm:$0xff]
  %v67 = vld [vmem:[%s1 + $0x140] sm:$0xff]
  %v68 = vld [vmem:[%s1 + $0x148] sm:$0xff]
  %v69 = vld [vmem:[%s1 + $0x150] sm:$0xff]
  %v70 = vld [vmem:[%s1 + $0x158] sm:$0xff]
  %v71 = vld [vmem:[%s1 + $0x160] sm:$0xff]
  %v72 = vld [vmem:[%s1 + $0x168] sm:$0xff]
  %v73 = vld [vmem:[%s1 + $0x170] sm:$0xff]
  %v74 = vld [vmem:[%s1 + $0x178] sm:$0xff]
  %v75 = vld [vmem:[%s1 + $0x180] sm:$0xff]
  %v76 = vld [vmem:[%s1 + $0x188] sm:$0xff]
  %v77 = vld [vmem:[%s1 + $0x190] sm:$0xff]
  %v78 = vld [vmem:[%s1 + $0x198] sm:$0xff]
  %v79 = vld [vmem:[%s1 + $0x1a0] sm:$0xff]
  %v80 = vld [vmem:[%s1 + $0x1a8] sm:$0xff]
  %v81 = vld [vmem:[%s1 + $0x1b0] sm:$0xff]
  %v82 = vld [vmem:[%s1 + $0x1b8] sm:$0xff]
  %v83 = vld [vmem:[%s1 + $0x1c0] sm:$0xff]
  %v84 = vld [vmem:[%s1 + $0x1c8] sm:$0xff]
  %v85 = vld [vmem:[%s1 + $0x1d0] sm:$0xff]
  %v86 = vld [vmem:[%s1 + $0x1d8] sm:$0xff]
  %v87 = vld [vmem:[%s1 + $0x1e0] sm:$0xff]
  %v88 = vld [vmem:[%s1 + $0x1e8] sm:$0xff]
  %v89 = vld [vmem:[%s1 + $0x1f0] sm:$0xff]
  %v90 = vld [vmem:[%s1 + $0x1f8] sm:$0xff]
  %v95 = vunpack.c.l.b16 %v23
  %v96 = vunpack.c.h.b16 %v23
  %v97 = vunpack.c.l.b16 %v24
  %v98 = vunpack.c.h.b16 %v24
  %v99 = vunpack.c.l.b16 %v25
  %v100 = vunpack.c.h.b16 %v25
  %v101 = vunpack.c.l.b16 %v26
  %v102 = vunpack.c.h.b16 %v26
  %v103 = vpack.c.b16 %v99, %v95
  %v104 = vpack.c.b16 %v100, %v96
  %v105 = vpack.c.b16 %v101, %v97
  %v106 = vpack.c.b16 %v102, %v98
  %v175 = vunpack.c.l.b16 %v27
  %v176 = vunpack.c.h.b16 %v27
  %v177 = vunpack.c.l.b16 %v28
  %v178 = vunpack.c.h.b16 %v28
  %v179 = vunpack.c.l.b16 %v29
  %v180 = vunpack.c.h.b16 %v29
  %v181 = vunpack.c.l.b16 %v30
  %v182 = vunpack.c.h.b16 %v30
  %v183 = vunpack.c.l.b16 %v31
  %v184 = vunpack.c.h.b16 %v31
  %v185 = vunpack.c.l.b16 %v32
  %v186 = vunpack.c.h.b16 %v32
  %v187 = vunpack.c.l.b16 %v33
  %v188 = vunpack.c.h.b16 %v33
  %v189 = vunpack.c.l.b16 %v34
  %v190 = vunpack.c.h.b16 %v34
  %v191 = vunpack.c.l.b16 %v35
  %v192 = vunpack.c.h.b16 %v35
  %v193 = vunpack.c.l.b16 %v36
  %v194 = vunpack.c.h.b16 %v36
  %v195 = vunpack.c.l.b16 %v37
  %v196 = vunpack.c.h.b16 %v37
  %v197 = vunpack.c.l.b16 %v38
  %v198 = vunpack.c.h.b16 %v38
  %v199 = vunpack.c.l.b16 %v39
  %v200 = vunpack.c.h.b16 %v39
  %v201 = vunpack.c.l.b16 %v40
  %v202 = vunpack.c.h.b16 %v40
  %v203 = vunpack.c.l.b16 %v41
  %v204 = vunpack.c.h.b16 %v41
  %v205 = vunpack.c.l.b16 %v42
  %v206 = vunpack.c.h.b16 %v42
  %v207 = vunpack.c.l.b16 %v43
  %v208 = vunpack.c.h.b16 %v43
  %v209 = vunpack.c.l.b16 %v44
  %v210 = vunpack.c.h.b16 %v44
  %v211 = vunpack.c.l.b16 %v45
  %v212 = vunpack.c.h.b16 %v45
  %v213 = vunpack.c.l.b16 %v46
  %v214 = vunpack.c.h.b16 %v46
  %v215 = vunpack.c.l.b16 %v47
  %v216 = vunpack.c.h.b16 %v47
  %v217 = vunpack.c.l.b16 %v48
  %v218 = vunpack.c.h.b16 %v48
  %v219 = vunpack.c.l.b16 %v49
  %v220 = vunpack.c.h.b16 %v49
  %v221 = vunpack.c.l.b16 %v50
  %v222 = vunpack.c.h.b16 %v50
  %v223 = vunpack.c.l.b16 %v51
  %v224 = vunpack.c.h.b16 %v51
  %v225 = vunpack.c.l.b16 %v52
  %v226 = vunpack.c.h.b16 %v52
  %v227 = vunpack.c.l.b16 %v53
  %v228 = vunpack.c.h.b16 %v53
  %v229 = vunpack.c.l.b16 %v54
  %v230 = vunpack.c.h.b16 %v54
  %v231 = vunpack.c.l.b16 %v55
  %v232 = vunpack.c.h.b16 %v55
  %v233 = vunpack.c.l.b16 %v56
  %v234 = vunpack.c.h.b16 %v56
  %v235 = vunpack.c.l.b16 %v57
  %v236 = vunpack.c.h.b16 %v57
  %v237 = vunpack.c.l.b16 %v58
  %v238 = vunpack.c.h.b16 %v58
  %v239 = vunpack.c.l.b16 %v59
  %v240 = vunpack.c.h.b16 %v59
  %v241 = vunpack.c.l.b16 %v60
  %v242 = vunpack.c.h.b16 %v60
  %v243 = vunpack.c.l.b16 %v61
  %v244 = vunpack.c.h.b16 %v61
  %v245 = vunpack.c.l.b16 %v62
  %v246 = vunpack.c.h.b16 %v62
  %v247 = vunpack.c.l.b16 %v63
  %v248 = vunpack.c.h.b16 %v63
  %v249 = vunpack.c.l.b16 %v64
  %v250 = vunpack.c.h.b16 %v64
  %v251 = vunpack.c.l.b16 %v65
  %v252 = vunpack.c.h.b16 %v65
  %v253 = vunpack.c.l.b16 %v66
  %v254 = vunpack.c.h.b16 %v66
  %v255 = vunpack.c.l.b16 %v67
  %v256 = vunpack.c.h.b16 %v67
  %v257 = vunpack.c.l.b16 %v68
  %v258 = vunpack.c.h.b16 %v68
  %v259 = vunpack.c.l.b16 %v69
  %v260 = vunpack.c.h.b16 %v69
  %v261 = vunpack.c.l.b16 %v70
  %v262 = vunpack.c.h.b16 %v70
  %v263 = vunpack.c.l.b16 %v71
  %v264 = vunpack.c.h.b16 %v71
  %v265 = vunpack.c.l.b16 %v72
  %v266 = vunpack.c.h.b16 %v72
  %v267 = vunpack.c.l.b16 %v73
  %v268 = vunpack.c.h.b16 %v73
  %v269 = vunpack.c.l.b16 %v74
  %v270 = vunpack.c.h.b16 %v74
  %v271 = vunpack.c.l.b16 %v75
  %v272 = vunpack.c.h.b16 %v75
  %v273 = vunpack.c.l.b16 %v76
  %v274 = vunpack.c.h.b16 %v76
  %v275 = vunpack.c.l.b16 %v77
  %v276 = vunpack.c.h.b16 %v77
  %v277 = vunpack.c.l.b16 %v78
  %v278 = vunpack.c.h.b16 %v78
  %v279 = vunpack.c.l.b16 %v79
  %v280 = vunpack.c.h.b16 %v79
  %v281 = vunpack.c.l.b16 %v80
  %v282 = vunpack.c.h.b16 %v80
  %v283 = vunpack.c.l.b16 %v81
  %v284 = vunpack.c.h.b16 %v81
  %v285 = vunpack.c.l.b16 %v82
  %v286 = vunpack.c.h.b16 %v82
  %v287 = vunpack.c.l.b16 %v83
  %v288 = vunpack.c.h.b16 %v83
  %v289 = vunpack.c.l.b16 %v84
  %v290 = vunpack.c.h.b16 %v84
  %v291 = vunpack.c.l.b16 %v85
  %v292 = vunpack.c.h.b16 %v85
  %v293 = vunpack.c.l.b16 %v86
  %v294 = vunpack.c.h.b16 %v86
  %v295 = vunpack.c.l.b16 %v87
  %v296 = vunpack.c.h.b16 %v87
  %v297 = vunpack.c.l.b16 %v88
  %v298 = vunpack.c.h.b16 %v88
  %v299 = vunpack.c.l.b16 %v89
  %v300 = vunpack.c.h.b16 %v89
  %v301 = vunpack.c.l.b16 %v90
  %v302 = vunpack.c.h.b16 %v90
  %v303 = vpack.c.b16 %v177, %v175
  %v304 = vpack.c.b16 %v178, %v176
  %v305 = vpack.c.b16 %v181, %v179
  %v306 = vpack.c.b16 %v182, %v180
  %v307 = vpack.c.b16 %v185, %v183
  %v308 = vpack.c.b16 %v186, %v184
  %v309 = vpack.c.b16 %v189, %v187
  %v310 = vpack.c.b16 %v190, %v188
  %v311 = vpack.c.b16 %v193, %v191
  %v312 = vpack.c.b16 %v194, %v192
  %v313 = vpack.c.b16 %v197, %v195
  %v314 = vpack.c.b16 %v198, %v196
  %v315 = vpack.c.b16 %v201, %v199
  %v316 = vpack.c.b16 %v202, %v200
  %v317 = vpack.c.b16 %v205, %v203
  %v318 = vpack.c.b16 %v206, %v204
  %v319 = vpack.c.b16 %v209, %v207
  %v320 = vpack.c.b16 %v210, %v208
  %v321 = vpack.c.b16 %v213, %v211
  %v322 = vpack.c.b16 %v214, %v212
  %v323 = vpack.c.b16 %v217, %v215
  %v324 = vpack.c.b16 %v218, %v216
  %v325 = vpack.c.b16 %v221, %v219
  %v326 = vpack.c.b16 %v222, %v220
  %v327 = vpack.c.b16 %v225, %v223
  %v328 = vpack.c.b16 %v226, %v224
  %v329 = vpack.c.b16 %v229, %v227
  %v330 = vpack.c.b16 %v230, %v228
  %v331 = vpack.c.b16 %v233, %v231
  %v332 = vpack.c.b16 %v234, %v232
  %v333 = vpack.c.b16 %v237, %v235
  %v334 = vpack.c.b16 %v238, %v236
  %v335 = vpack.c.b16 %v241, %v239
  %v336 = vpack.c.b16 %v242, %v240
  %v337 = vpack.c.b16 %v245, %v243
  %v338 = vpack.c.b16 %v246, %v244
  %v339 = vpack.c.b16 %v249, %v247
  %v340 = vpack.c.b16 %v250, %v248
  %v341 = vpack.c.b16 %v253, %v251
  %v342 = vpack.c.b16 %v254, %v252
  %v343 = vpack.c.b16 %v257, %v255
  %v344 = vpack.c.b16 %v258, %v256
  %v345 = vpack.c.b16 %v261, %v259
  %v346 = vpack.c.b16 %v262, %v260
  %v347 = vpack.c.b16 %v265, %v263
  %v348 = vpack.c.b16 %v266, %v264
  %v349 = vpack.c.b16 %v269, %v267
  %v350 = vpack.c.b16 %v270, %v268
  %v351 = vpack.c.b16 %v273, %v271
  %v352 = vpack.c.b16 %v274, %v272
  %v353 = vpack.c.b16 %v277, %v275
  %v354 = vpack.c.b16 %v278, %v276
  %v355 = vpack.c.b16 %v281, %v279
  %v356 = vpack.c.b16 %v282, %v280
  %v357 = vpack.c.b16 %v285, %v283
  %v358 = vpack.c.b16 %v286, %v284
  %v359 = vpack.c.b16 %v289, %v287
  %v360 = vpack.c.b16 %v290, %v288
  %v361 = vpack.c.b16 %v293, %v291
  %v362 = vpack.c.b16 %v294, %v292
  %v363 = vpack.c.b16 %v297, %v295
  %v364 = vpack.c.b16 %v298, %v296
  %v365 = vpack.c.b16 %v301, %v299
  %v366 = vpack.c.b16 %v302, %v300
  %431 = vmatprep.subr.bf16.mxu0 %v304
  %432 = vmatpush1.bf16.msra.mxu0 %v303
  %433 = vmatprep.subr.bf16.mxu0 %v306
  %434 = vmatpush1.bf16.msra.mxu0 %v305
  %435 = vmatprep.subr.bf16.mxu0 %v308
  %436 = vmatpush1.bf16.msra.mxu0 %v307
  %437 = vmatprep.subr.bf16.mxu0 %v310
  %438 = vmatpush1.bf16.msra.mxu0 %v309
  %439 = vmatprep.subr.bf16.mxu0 %v312
  %440 = vmatpush1.bf16.msra.mxu0 %v311
  %441 = vmatprep.subr.bf16.mxu0 %v314
  %442 = vmatpush1.bf16.msra.mxu0 %v313
  %443 = vmatprep.subr.bf16.mxu0 %v316
  %444 = vmatpush1.bf16.msra.mxu0 %v315
  %445 = vmatprep.subr.bf16.mxu0 %v318
  %446 = vmatpush1.bf16.msra.mxu0 %v317
  %447 = vmatprep.subr.bf16.mxu0 %v320
  %448 = vmatpush1.bf16.msra.mxu0 %v319
  %449 = vmatprep.subr.bf16.mxu0 %v322
  %450 = vmatpush1.bf16.msra.mxu0 %v321
  %451 = vmatprep.subr.bf16.mxu0 %v324
  %452 = vmatpush1.bf16.msra.mxu0 %v323
  %453 = vmatprep.subr.bf16.mxu0 %v326
  %454 = vmatpush1.bf16.msra.mxu0 %v325
  %455 = vmatprep.subr.bf16.mxu0 %v328
  %456 = vmatpush1.bf16.msra.mxu0 %v327
  %457 = vmatprep.subr.bf16.mxu0 %v330
  %458 = vmatpush1.bf16.msra.mxu0 %v329
  %459 = vmatprep.subr.bf16.mxu0 %v332
  %460 = vmatpush1.bf16.msra.mxu0 %v331
  %461 = vmatprep.subr.bf16.mxu0 %v334
  %462 = vmatpush1.bf16.msra.mxu0 %v333
  %463 = vmatprep.mubr.bf16.mxu0 %v104
  %464 = vmatmul.mubr.bf16.gmra.mrb[0].mxu0 %v103
  %v465 = vpop.f32.mrb[0].mxu0
  %v466 = vadd.f32 0.0, %v465
  %v467 = vpop.f32.mrb[0].mxu0
  %v468 = vadd.f32 0.0, %v467
  %v469 = vpop.f32.mrb[0].mxu0
  %v470 = vadd.f32 0.0, %v469
  %v471 = vpop.f32.mrb[0].mxu0
  %v472 = vadd.f32 0.0, %v471
  %473 = vdwg.mxu0
  %474 = vmatprep.subr.bf16.mxu0 %v336
  %475 = vmatpush1.bf16.msra.mxu0 %v335
  %476 = vmatprep.subr.bf16.mxu0 %v338
  %477 = vmatpush1.bf16.msra.mxu0 %v337
  %478 = vmatprep.subr.bf16.mxu0 %v340
  %479 = vmatpush1.bf16.msra.mxu0 %v339
  %480 = vmatprep.subr.bf16.mxu0 %v342
  %481 = vmatpush1.bf16.msra.mxu0 %v341
  %482 = vmatprep.subr.bf16.mxu0 %v344
  %483 = vmatpush1.bf16.msra.mxu0 %v343
  %484 = vmatprep.subr.bf16.mxu0 %v346
  %485 = vmatpush1.bf16.msra.mxu0 %v345
  %486 = vmatprep.subr.bf16.mxu0 %v348
  %487 = vmatpush1.bf16.msra.mxu0 %v347
  %488 = vmatprep.subr.bf16.mxu0 %v350
  %489 = vmatpush1.bf16.msra.mxu0 %v349
  %490 = vmatprep.subr.bf16.mxu0 %v352
  %491 = vmatpush1.bf16.msra.mxu0 %v351
  %492 = vmatprep.subr.bf16.mxu0 %v354
  %493 = vmatpush1.bf16.msra.mxu0 %v353
  %494 = vmatprep.subr.bf16.mxu0 %v356
  %495 = vmatpush1.bf16.msra.mxu0 %v355
  %496 = vmatprep.subr.bf16.mxu0 %v358
  %497 = vmatpush1.bf16.msra.mxu0 %v357
  %498 = vmatprep.subr.bf16.mxu0 %v360
  %499 = vmatpush1.bf16.msra.mxu0 %v359
  %500 = vmatprep.subr.bf16.mxu0 %v362
  %501 = vmatpush1.bf16.msra.mxu0 %v361
  %502 = vmatprep.subr.bf16.mxu0 %v364
  %503 = vmatpush1.bf16.msra.mxu0 %v363
  %504 = vmatprep.subr.bf16.mxu0 %v366
  %505 = vmatpush1.bf16.msra.mxu0 %v365
  %506 = vmatprep.mubr.bf16.mxu0 %v106
  %507 = vmatmul.mubr.bf16.gmra.mrb[0].mxu0 %v105
  %v508 = vpop.f32.mrb[0].mxu0
  %v509 = vadd.f32 %v466, %v508
  %v510 = vpop.f32.mrb[0].mxu0
  %v511 = vadd.f32 %v468, %v510
  %v512 = vpop.f32.mrb[0].mxu0
  %v513 = vadd.f32 %v470, %v512
  %v514 = vpop.f32.mrb[0].mxu0
  %v515 = vadd.f32 %v472, %v514
  %516 = vdwg.mxu0
  %v517 = vld [vmem:[%s2] sm:$0x3]
  %v518 = vadd.f32 %v509, %v513
  %v519 = vrot.slane %v518, 4
  %v520 = vadd.f32 %v518, %v519
  %v521 = vrot.slane %v520, 2
  %v522 = vadd.f32 %v520, %v521
  %v523 = vrot.slane %v522, 1
  %v524 = vadd.f32 %v522, %v523
  %v525 = vadd.f32 %v511, %v515
  %v526 = vrot.slane %v525, 4
  %v527 = vadd.f32 %v525, %v526
  %v528 = vrot.slane %v527, 2
  %v529 = vadd.f32 %v527, %v528
  %v530 = vrot.slane %v529, 1
  %v531 = vadd.f32 %v529, %v530
  %v534 = vcombine.low %v524, %v531
  %v536 = vunpack.c.l.s4 1966171168
  %v537 = vunpack.c.0.s8 %v536
  %v538 = vlaneseq
  %v539 = vshrl.u32 %v538, 7
  %v540 = vsub.s32 %v537, %v539
  %v541 = vrot.slane %v534, %v540
  %v543 = vunpack.c.l.s4 1966171168
  %v544 = vunpack.c.0.s8 %v543
  %v545 = vlaneseq
  %v546 = vshrl.u32 %v545, 7
  %v547 = vsub.s32 %v544, %v546
  %v548 = vrot.slane %v541, %v547
  %v550 = vadd.f32 %v517, %v548
  %v551 = vlaneseq
  %vm552 = vcmp.ge.s32.totalorder %v551, 0
  %vm553 = vcmp.lt.s32.totalorder %v551, 256
  %vm554 = vmand %vm552, %vm553
  %555 = vst.msk [vmem:[%s2] sm:$0x3] %vm554, %v550
  %v556 = vld [vmem:[%s3] sm:$0x3]
  %v557 = vmul.f32 %v509, %v509
  %v558 = vmul.f32 %v511, %v511
  %v559 = vmul.f32 %v513, %v513
  %v560 = vmul.f32 %v515, %v515
  %v561 = vadd.f32 %v557, %v559
  %v562 = vrot.slane %v561, 4
  %v563 = vadd.f32 %v561, %v562
  %v564 = vrot.slane %v563, 2
  %v565 = vadd.f32 %v563, %v564
  %v566 = vrot.slane %v565, 1
  %v567 = vadd.f32 %v565, %v566
  %v568 = vadd.f32 %v558, %v560
  %v569 = vrot.slane %v568, 4
  %v570 = vadd.f32 %v568, %v569
  %v571 = vrot.slane %v570, 2
  %v572 = vadd.f32 %v570, %v571
  %v573 = vrot.slane %v572, 1
  %v574 = vadd.f32 %v572, %v573
  %v577 = vcombine.low %v567, %v574
  %v579 = vunpack.c.l.s4 1966171168
  %v580 = vunpack.c.0.s8 %v579
  %v581 = vlaneseq
  %v582 = vshrl.u32 %v581, 7
  %v583 = vsub.s32 %v580, %v582
  %v584 = vrot.slane %v577, %v583
  %v586 = vunpack.c.l.s4 1966171168
  %v587 = vunpack.c.0.s8 %v586
  %v588 = vlaneseq
  %v589 = vshrl.u32 %v588, 7
  %v590 = vsub.s32 %v587, %v589
  %v591 = vrot.slane %v584, %v590
  %v593 = vadd.f32 %v556, %v591
  %594 = vst.msk [vmem:[%s3] sm:$0x3] %vm554, %v593
  // Predicated region
  $region14: #{alpha_classifier.2} parent=0 // pred_check
    _
  $region15: #{alpha_classifier.2} parent=0 // pred_check_branch
    %596 = sbr.rel (0) target = $region17
  $region16: #{alpha_classifier.2} parent=0 // pred_region
    _
  $region17: #{alpha_classifier.2} parent=0 // pred_fallthru
    _
  // Predicated region
  $region18: #{alpha_classifier.2} parent=0 // pred_check
    _
  $region19: #{alpha_classifier.2} parent=0 // pred_check_branch
    %598 = sbr.rel (0) target = $region21
  $region20: #{alpha_classifier.2} parent=0 // pred_region
    _
  $region21: #{alpha_classifier.2} parent=0 // pred_fallthru
    _
  // Predicated region
  $region22: #{alpha_classifier.2} parent=0 // pred_check
    _
  $region23: #{alpha_classifier.2} parent=0 // pred_check_branch
    %600 = sbr.rel (0) target = $region25
  $region24: #{alpha_classifier.2} parent=0 // pred_region
    _
  $region25: #{alpha_classifier.2} parent=0 // pred_fallthru
    _
  // Predicated region
  $region26: #{alpha_classifier.2} parent=0 // pred_check
    _
  $region27: #{alpha_classifier.2} parent=0 // pred_check_branch
    %602 = sbr.rel (0) target = $region29
  $region28: #{alpha_classifier.2} parent=0 // pred_region
    _
  $region29: #{alpha_classifier.2} parent=0 // pred_fallthru
    _

// kernel: alpha_classifier.3
$region0: #{alpha_classifier.3}
  #allocation0 [shape = 'u32[]', space=smem, size = 0x4, offset = 0x4, fixed_abs, tag = 'smem constant byte address 0x4 - core index']
  #allocation1 [shape = 'u32[144,128]{1,0:T(1,128)}', space=vmem, size = 0x12000, scoped, tag = 'internal scratch']
  %s0 = inlined_call_operand.vmem [shape: bf16[16,512], index: 0, kind: input, shape index: {}]
  %s1 = inlined_call_operand.vmem [shape: bf16[512,256], index: 1, kind: input, shape index: {}]
  %s2 = inlined_call_operand.vmem [shape: f32[1,256], index: 2, kind: input, shape index: {}]
  %s3 = inlined_call_operand.vmem [shape: f32[1,256], index: 3, kind: input, shape index: {}]
  %s4 = inlined_call_operand.vmem [shape: bf16[256,128], index: 4, kind: input, shape index: {}]
  %s5 = inlined_call_operand.vmem [shape: f32[1,128], index: 5, kind: input, shape index: {}]
  %s6 = inlined_call_operand.vmem [shape: f32[16,128], index: 6, kind: output, shape index: {}]
  %s7 = sld [smem:[#allocation0]]
  $region34: #{alpha_classifier.3} parent=0
    _
  %s9 = ssub.s32 1, %s7
  %s10 = scalar_select 0, %s9, %s7
  // Predicated region
  $region2: #{alpha_classifier.3} parent=0 // pred_check
    _
  $region3: #{alpha_classifier.3} parent=0 // pred_check_branch
    %12 = sbr.rel (0) target = $region5
  $region4: #{alpha_classifier.3} parent=0 // pred_region
    _
  $region5: #{alpha_classifier.3} parent=0 // pred_fallthru
    _
  // Predicated region
  $region6: #{alpha_classifier.3} parent=0 // pred_check
    _
  $region7: #{alpha_classifier.3} parent=0 // pred_check_branch
    %14 = sbr.rel (0) target = $region9
  $region8: #{alpha_classifier.3} parent=0 // pred_region
    _
  $region9: #{alpha_classifier.3} parent=0 // pred_fallthru
    _
  // Predicated region
  $region10: #{alpha_classifier.3} parent=0 // pred_check
    _
  $region11: #{alpha_classifier.3} parent=0 // pred_check_branch
    %16 = sbr.rel (0) target = $region13
  $region12: #{alpha_classifier.3} parent=0 // pred_region
    _
  $region13: #{alpha_classifier.3} parent=0 // pred_fallthru
    _
  // Predicated region
  $region14: #{alpha_classifier.3} parent=0 // pred_check
    _
  $region15: #{alpha_classifier.3} parent=0 // pred_check_branch
    %18 = sbr.rel (0) target = $region17
  $region16: #{alpha_classifier.3} parent=0 // pred_region
    _
  $region17: #{alpha_classifier.3} parent=0 // pred_fallthru
    _
  // Predicated region
  $region18: #{alpha_classifier.3} parent=0 // pred_check
    _
  $region19: #{alpha_classifier.3} parent=0 // pred_check_branch
    %20 = sbr.rel (0) target = $region21
  $region20: #{alpha_classifier.3} parent=0 // pred_region
    _
  $region21: #{alpha_classifier.3} parent=0 // pred_fallthru
    _
  // Predicated region
  $region22: #{alpha_classifier.3} parent=0 // pred_check
    _
  $region23: #{alpha_classifier.3} parent=0 // pred_check_branch
    %22 = sbr.rel (0) target = $region25
  $region24: #{alpha_classifier.3} parent=0 // pred_region
    _
  $region25: #{alpha_classifier.3} parent=0 // pred_fallthru
    _
  %v24 = vld [vmem:[%s0] sm:$0xff]
  %v25 = vld [vmem:[%s0 + $0x8] sm:$0xff]
  %v26 = vld [vmem:[%s0 + $0x10] sm:$0xff]
  %v27 = vld [vmem:[%s0 + $0x18] sm:$0xff]
  %v28 = vld [vmem:[%s1] sm:$0xff]
  %v29 = vld [vmem:[%s1 + $0x8] sm:$0xff]
  %v30 = vld [vmem:[%s1 + $0x10] sm:$0xff]
  %v31 = vld [vmem:[%s1 + $0x18] sm:$0xff]
  %v32 = vld [vmem:[%s1 + $0x20] sm:$0xff]
  %v33 = vld [vmem:[%s1 + $0x28] sm:$0xff]
  %v34 = vld [vmem:[%s1 + $0x30] sm:$0xff]
  %v35 = vld [vmem:[%s1 + $0x38] sm:$0xff]
  %v36 = vld [vmem:[%s1 + $0x40] sm:$0xff]
  %v37 = vld [vmem:[%s1 + $0x48] sm:$0xff]
  %v38 = vld [vmem:[%s1 + $0x50] sm:$0xff]
  %v39 = vld [vmem:[%s1 + $0x58] sm:$0xff]
  %v40 = vld [vmem:[%s1 + $0x60] sm:$0xff]
  %v41 = vld [vmem:[%s1 + $0x68] sm:$0xff]
  %v42 = vld [vmem:[%s1 + $0x70] sm:$0xff]
  %v43 = vld [vmem:[%s1 + $0x78] sm:$0xff]
  %v44 = vld [vmem:[%s1 + $0x80] sm:$0xff]
  %v45 = vld [vmem:[%s1 + $0x88] sm:$0xff]
  %v46 = vld [vmem:[%s1 + $0x90] sm:$0xff]
  %v47 = vld [vmem:[%s1 + $0x98] sm:$0xff]
  %v48 = vld [vmem:[%s1 + $0xa0] sm:$0xff]
  %v49 = vld [vmem:[%s1 + $0xa8] sm:$0xff]
  %v50 = vld [vmem:[%s1 + $0xb0] sm:$0xff]
  %v51 = vld [vmem:[%s1 + $0xb8] sm:$0xff]
  %v52 = vld [vmem:[%s1 + $0xc0] sm:$0xff]
  %v53 = vld [vmem:[%s1 + $0xc8] sm:$0xff]
  %v54 = vld [vmem:[%s1 + $0xd0] sm:$0xff]
  %v55 = vld [vmem:[%s1 + $0xd8] sm:$0xff]
  %v56 = vld [vmem:[%s1 + $0xe0] sm:$0xff]
  %v57 = vld [vmem:[%s1 + $0xe8] sm:$0xff]
  %v58 = vld [vmem:[%s1 + $0xf0] sm:$0xff]
  %v59 = vld [vmem:[%s1 + $0xf8] sm:$0xff]
  %v60 = vld [vmem:[%s1 + $0x100] sm:$0xff]
  %v61 = vld [vmem:[%s1 + $0x108] sm:$0xff]
  %v62 = vld [vmem:[%s1 + $0x110] sm:$0xff]
  %v63 = vld [vmem:[%s1 + $0x118] sm:$0xff]
  %v64 = vld [vmem:[%s1 + $0x120] sm:$0xff]
  %v65 = vld [vmem:[%s1 + $0x128] sm:$0xff]
  %v66 = vld [vmem:[%s1 + $0x130] sm:$0xff]
  %v67 = vld [vmem:[%s1 + $0x138] sm:$0xff]
  %v68 = vld [vmem:[%s1 + $0x140] sm:$0xff]
  %v69 = vld [vmem:[%s1 + $0x148] sm:$0xff]
  %v70 = vld [vmem:[%s1 + $0x150] sm:$0xff]
  %v71 = vld [vmem:[%s1 + $0x158] sm:$0xff]
  %v72 = vld [vmem:[%s1 + $0x160] sm:$0xff]
  %v73 = vld [vmem:[%s1 + $0x168] sm:$0xff]
  %v74 = vld [vmem:[%s1 + $0x170] sm:$0xff]
  %v75 = vld [vmem:[%s1 + $0x178] sm:$0xff]
  %v76 = vld [vmem:[%s1 + $0x180] sm:$0xff]
  %v77 = vld [vmem:[%s1 + $0x188] sm:$0xff]
  %v78 = vld [vmem:[%s1 + $0x190] sm:$0xff]
  %v79 = vld [vmem:[%s1 + $0x198] sm:$0xff]
  %v80 = vld [vmem:[%s1 + $0x1a0] sm:$0xff]
  %v81 = vld [vmem:[%s1 + $0x1a8] sm:$0xff]
  %v82 = vld [vmem:[%s1 + $0x1b0] sm:$0xff]
  %v83 = vld [vmem:[%s1 + $0x1b8] sm:$0xff]
  %v84 = vld [vmem:[%s1 + $0x1c0] sm:$0xff]
  %v85 = vld [vmem:[%s1 + $0x1c8] sm:$0xff]
  %v86 = vld [vmem:[%s1 + $0x1d0] sm:$0xff]
  %v87 = vld [vmem:[%s1 + $0x1d8] sm:$0xff]
  %v88 = vld [vmem:[%s1 + $0x1e0] sm:$0xff]
  %v89 = vld [vmem:[%s1 + $0x1e8] sm:$0xff]
  %v90 = vld [vmem:[%s1 + $0x1f0] sm:$0xff]
  %v91 = vld [vmem:[%s1 + $0x1f8] sm:$0xff]
  %v96 = vunpack.c.l.b16 %v24
  %v97 = vunpack.c.h.b16 %v24
  %v98 = vunpack.c.l.b16 %v25
  %v99 = vunpack.c.h.b16 %v25
  %v100 = vunpack.c.l.b16 %v26
  %v101 = vunpack.c.h.b16 %v26
  %v102 = vunpack.c.l.b16 %v27
  %v103 = vunpack.c.h.b16 %v27
  %v104 = vpack.c.b16 %v100, %v96
  %v105 = vpack.c.b16 %v101, %v97
  %v106 = vpack.c.b16 %v102, %v98
  %v107 = vpack.c.b16 %v103, %v99
  %v176 = vunpack.c.l.b16 %v28
  %v177 = vunpack.c.h.b16 %v28
  %v178 = vunpack.c.l.b16 %v29
  %v179 = vunpack.c.h.b16 %v29
  %v180 = vunpack.c.l.b16 %v30
  %v181 = vunpack.c.h.b16 %v30
  %v182 = vunpack.c.l.b16 %v31
  %v183 = vunpack.c.h.b16 %v31
  %v184 = vunpack.c.l.b16 %v32
  %v185 = vunpack.c.h.b16 %v32
  %v186 = vunpack.c.l.b16 %v33
  %v187 = vunpack.c.h.b16 %v33
  %v188 = vunpack.c.l.b16 %v34
  %v189 = vunpack.c.h.b16 %v34
  %v190 = vunpack.c.l.b16 %v35
  %v191 = vunpack.c.h.b16 %v35
  %v192 = vunpack.c.l.b16 %v36
  %v193 = vunpack.c.h.b16 %v36
  %v194 = vunpack.c.l.b16 %v37
  %v195 = vunpack.c.h.b16 %v37
  %v196 = vunpack.c.l.b16 %v38
  %v197 = vunpack.c.h.b16 %v38
  %v198 = vunpack.c.l.b16 %v39
  %v199 = vunpack.c.h.b16 %v39
  %v200 = vunpack.c.l.b16 %v40
  %v201 = vunpack.c.h.b16 %v40
  %v202 = vunpack.c.l.b16 %v41
  %v203 = vunpack.c.h.b16 %v41
  %v204 = vunpack.c.l.b16 %v42
  %v205 = vunpack.c.h.b16 %v42
  %v206 = vunpack.c.l.b16 %v43
  %v207 = vunpack.c.h.b16 %v43
  %v208 = vunpack.c.l.b16 %v44
  %v209 = vunpack.c.h.b16 %v44
  %v210 = vunpack.c.l.b16 %v45
  %v211 = vunpack.c.h.b16 %v45
  %v212 = vunpack.c.l.b16 %v46
  %v213 = vunpack.c.h.b16 %v46
  %v214 = vunpack.c.l.b16 %v47
  %v215 = vunpack.c.h.b16 %v47
  %v216 = vunpack.c.l.b16 %v48
  %v217 = vunpack.c.h.b16 %v48
  %v218 = vunpack.c.l.b16 %v49
  %v219 = vunpack.c.h.b16 %v49
  %v220 = vunpack.c.l.b16 %v50
  %v221 = vunpack.c.h.b16 %v50
  %v222 = vunpack.c.l.b16 %v51
  %v223 = vunpack.c.h.b16 %v51
  %v224 = vunpack.c.l.b16 %v52
  %v225 = vunpack.c.h.b16 %v52
  %v226 = vunpack.c.l.b16 %v53
  %v227 = vunpack.c.h.b16 %v53
  %v228 = vunpack.c.l.b16 %v54
  %v229 = vunpack.c.h.b16 %v54
  %v230 = vunpack.c.l.b16 %v55
  %v231 = vunpack.c.h.b16 %v55
  %v232 = vunpack.c.l.b16 %v56
  %v233 = vunpack.c.h.b16 %v56
  %v234 = vunpack.c.l.b16 %v57
  %v235 = vunpack.c.h.b16 %v57
  %v236 = vunpack.c.l.b16 %v58
  %v237 = vunpack.c.h.b16 %v58
  %v238 = vunpack.c.l.b16 %v59
  %v239 = vunpack.c.h.b16 %v59
  %v240 = vunpack.c.l.b16 %v60
  %v241 = vunpack.c.h.b16 %v60
  %v242 = vunpack.c.l.b16 %v61
  %v243 = vunpack.c.h.b16 %v61
  %v244 = vunpack.c.l.b16 %v62
  %v245 = vunpack.c.h.b16 %v62
  %v246 = vunpack.c.l.b16 %v63
  %v247 = vunpack.c.h.b16 %v63
  %v248 = vunpack.c.l.b16 %v64
  %v249 = vunpack.c.h.b16 %v64
  %v250 = vunpack.c.l.b16 %v65
  %v251 = vunpack.c.h.b16 %v65
  %v252 = vunpack.c.l.b16 %v66
  %v253 = vunpack.c.h.b16 %v66
  %v254 = vunpack.c.l.b16 %v67
  %v255 = vunpack.c.h.b16 %v67
  %v256 = vunpack.c.l.b16 %v68
  %v257 = vunpack.c.h.b16 %v68
  %v258 = vunpack.c.l.b16 %v69
  %v259 = vunpack.c.h.b16 %v69
  %v260 = vunpack.c.l.b16 %v70
  %v261 = vunpack.c.h.b16 %v70
  %v262 = vunpack.c.l.b16 %v71
  %v263 = vunpack.c.h.b16 %v71
  %v264 = vunpack.c.l.b16 %v72
  %v265 = vunpack.c.h.b16 %v72
  %v266 = vunpack.c.l.b16 %v73
  %v267 = vunpack.c.h.b16 %v73
  %v268 = vunpack.c.l.b16 %v74
  %v269 = vunpack.c.h.b16 %v74
  %v270 = vunpack.c.l.b16 %v75
  %v271 = vunpack.c.h.b16 %v75
  %v272 = vunpack.c.l.b16 %v76
  %v273 = vunpack.c.h.b16 %v76
  %v274 = vunpack.c.l.b16 %v77
  %v275 = vunpack.c.h.b16 %v77
  %v276 = vunpack.c.l.b16 %v78
  %v277 = vunpack.c.h.b16 %v78
  %v278 = vunpack.c.l.b16 %v79
  %v279 = vunpack.c.h.b16 %v79
  %v280 = vunpack.c.l.b16 %v80
  %v281 = vunpack.c.h.b16 %v80
  %v282 = vunpack.c.l.b16 %v81
  %v283 = vunpack.c.h.b16 %v81
  %v284 = vunpack.c.l.b16 %v82
  %v285 = vunpack.c.h.b16 %v82
  %v286 = vunpack.c.l.b16 %v83
  %v287 = vunpack.c.h.b16 %v83
  %v288 = vunpack.c.l.b16 %v84
  %v289 = vunpack.c.h.b16 %v84
  %v290 = vunpack.c.l.b16 %v85
  %v291 = vunpack.c.h.b16 %v85
  %v292 = vunpack.c.l.b16 %v86
  %v293 = vunpack.c.h.b16 %v86
  %v294 = vunpack.c.l.b16 %v87
  %v295 = vunpack.c.h.b16 %v87
  %v296 = vunpack.c.l.b16 %v88
  %v297 = vunpack.c.h.b16 %v88
  %v298 = vunpack.c.l.b16 %v89
  %v299 = vunpack.c.h.b16 %v89
  %v300 = vunpack.c.l.b16 %v90
  %v301 = vunpack.c.h.b16 %v90
  %v302 = vunpack.c.l.b16 %v91
  %v303 = vunpack.c.h.b16 %v91
  %v304 = vpack.c.b16 %v178, %v176
  %v305 = vpack.c.b16 %v179, %v177
  %v306 = vpack.c.b16 %v182, %v180
  %v307 = vpack.c.b16 %v183, %v181
  %v308 = vpack.c.b16 %v186, %v184
  %v309 = vpack.c.b16 %v187, %v185
  %v310 = vpack.c.b16 %v190, %v188
  %v311 = vpack.c.b16 %v191, %v189
  %v312 = vpack.c.b16 %v194, %v192
  %v313 = vpack.c.b16 %v195, %v193
  %v314 = vpack.c.b16 %v198, %v196
  %v315 = vpack.c.b16 %v199, %v197
  %v316 = vpack.c.b16 %v202, %v200
  %v317 = vpack.c.b16 %v203, %v201
  %v318 = vpack.c.b16 %v206, %v204
  %v319 = vpack.c.b16 %v207, %v205
  %v320 = vpack.c.b16 %v210, %v208
  %v321 = vpack.c.b16 %v211, %v209
  %v322 = vpack.c.b16 %v214, %v212
  %v323 = vpack.c.b16 %v215, %v213
  %v324 = vpack.c.b16 %v218, %v216
  %v325 = vpack.c.b16 %v219, %v217
  %v326 = vpack.c.b16 %v222, %v220
  %v327 = vpack.c.b16 %v223, %v221
  %v328 = vpack.c.b16 %v226, %v224
  %v329 = vpack.c.b16 %v227, %v225
  %v330 = vpack.c.b16 %v230, %v228
  %v331 = vpack.c.b16 %v231, %v229
  %v332 = vpack.c.b16 %v234, %v232
  %v333 = vpack.c.b16 %v235, %v233
  %v334 = vpack.c.b16 %v238, %v236
  %v335 = vpack.c.b16 %v239, %v237
  %v336 = vpack.c.b16 %v242, %v240
  %v337 = vpack.c.b16 %v243, %v241
  %v338 = vpack.c.b16 %v246, %v244
  %v339 = vpack.c.b16 %v247, %v245
  %v340 = vpack.c.b16 %v250, %v248
  %v341 = vpack.c.b16 %v251, %v249
  %v342 = vpack.c.b16 %v254, %v252
  %v343 = vpack.c.b16 %v255, %v253
  %v344 = vpack.c.b16 %v258, %v256
  %v345 = vpack.c.b16 %v259, %v257
  %v346 = vpack.c.b16 %v262, %v260
  %v347 = vpack.c.b16 %v263, %v261
  %v348 = vpack.c.b16 %v266, %v264
  %v349 = vpack.c.b16 %v267, %v265
  %v350 = vpack.c.b16 %v270, %v268
  %v351 = vpack.c.b16 %v271, %v269
  %v352 = vpack.c.b16 %v274, %v272
  %v353 = vpack.c.b16 %v275, %v273
  %v354 = vpack.c.b16 %v278, %v276
  %v355 = vpack.c.b16 %v279, %v277
  %v356 = vpack.c.b16 %v282, %v280
  %v357 = vpack.c.b16 %v283, %v281
  %v358 = vpack.c.b16 %v286, %v284
  %v359 = vpack.c.b16 %v287, %v285
  %v360 = vpack.c.b16 %v290, %v288
  %v361 = vpack.c.b16 %v291, %v289
  %v362 = vpack.c.b16 %v294, %v292
  %v363 = vpack.c.b16 %v295, %v293
  %v364 = vpack.c.b16 %v298, %v296
  %v365 = vpack.c.b16 %v299, %v297
  %v366 = vpack.c.b16 %v302, %v300
  %v367 = vpack.c.b16 %v303, %v301
  %432 = vmatprep.subr.bf16.mxu0 %v305
  %433 = vmatpush1.bf16.msra.mxu0 %v304
  %434 = vmatprep.subr.bf16.mxu0 %v307
  %435 = vmatpush1.bf16.msra.mxu0 %v306
  %436 = vmatprep.subr.bf16.mxu0 %v309
  %437 = vmatpush1.bf16.msra.mxu0 %v308
  %438 = vmatprep.subr.bf16.mxu0 %v311
  %439 = vmatpush1.bf16.msra.mxu0 %v310
  %440 = vmatprep.subr.bf16.mxu0 %v313
  %441 = vmatpush1.bf16.msra.mxu0 %v312
  %442 = vmatprep.subr.bf16.mxu0 %v315
  %443 = vmatpush1.bf16.msra.mxu0 %v314
  %444 = vmatprep.subr.bf16.mxu0 %v317
  %445 = vmatpush1.bf16.msra.mxu0 %v316
  %446 = vmatprep.subr.bf16.mxu0 %v319
  %447 = vmatpush1.bf16.msra.mxu0 %v318
  %448 = vmatprep.subr.bf16.mxu0 %v321
  %449 = vmatpush1.bf16.msra.mxu0 %v320
  %450 = vmatprep.subr.bf16.mxu0 %v323
  %451 = vmatpush1.bf16.msra.mxu0 %v322
  %452 = vmatprep.subr.bf16.mxu0 %v325
  %453 = vmatpush1.bf16.msra.mxu0 %v324
  %454 = vmatprep.subr.bf16.mxu0 %v327
  %455 = vmatpush1.bf16.msra.mxu0 %v326
  %456 = vmatprep.subr.bf16.mxu0 %v329
  %457 = vmatpush1.bf16.msra.mxu0 %v328
  %458 = vmatprep.subr.bf16.mxu0 %v331
  %459 = vmatpush1.bf16.msra.mxu0 %v330
  %460 = vmatprep.subr.bf16.mxu0 %v333
  %461 = vmatpush1.bf16.msra.mxu0 %v332
  %462 = vmatprep.subr.bf16.mxu0 %v335
  %463 = vmatpush1.bf16.msra.mxu0 %v334
  %464 = vmatprep.mubr.bf16.mxu0 %v105
  %465 = vmatmul.mubr.bf16.gmra.mrb[0].mxu0 %v104
  %v466 = vpop.f32.mrb[0].mxu0
  %v467 = vadd.f32 0.0, %v466
  %v468 = vpop.f32.mrb[0].mxu0
  %v469 = vadd.f32 0.0, %v468
  %v470 = vpop.f32.mrb[0].mxu0
  %v471 = vadd.f32 0.0, %v470
  %v472 = vpop.f32.mrb[0].mxu0
  %v473 = vadd.f32 0.0, %v472
  %474 = vdwg.mxu0
  %475 = vmatprep.subr.bf16.mxu0 %v337
  %476 = vmatpush1.bf16.msra.mxu0 %v336
  %477 = vmatprep.subr.bf16.mxu0 %v339
  %478 = vmatpush1.bf16.msra.mxu0 %v338
  %479 = vmatprep.subr.bf16.mxu0 %v341
  %480 = vmatpush1.bf16.msra.mxu0 %v340
  %481 = vmatprep.subr.bf16.mxu0 %v343
  %482 = vmatpush1.bf16.msra.mxu0 %v342
  %483 = vmatprep.subr.bf16.mxu0 %v345
  %484 = vmatpush1.bf16.msra.mxu0 %v344
  %485 = vmatprep.subr.bf16.mxu0 %v347
  %486 = vmatpush1.bf16.msra.mxu0 %v346
  %487 = vmatprep.subr.bf16.mxu0 %v349
  %488 = vmatpush1.bf16.msra.mxu0 %v348
  %489 = vmatprep.subr.bf16.mxu0 %v351
  %490 = vmatpush1.bf16.msra.mxu0 %v350
  %491 = vmatprep.subr.bf16.mxu0 %v353
  %492 = vmatpush1.bf16.msra.mxu0 %v352
  %493 = vmatprep.subr.bf16.mxu0 %v355
  %494 = vmatpush1.bf16.msra.mxu0 %v354
  %495 = vmatprep.subr.bf16.mxu0 %v357
  %496 = vmatpush1.bf16.msra.mxu0 %v356
  %497 = vmatprep.subr.bf16.mxu0 %v359
  %498 = vmatpush1.bf16.msra.mxu0 %v358
  %499 = vmatprep.subr.bf16.mxu0 %v361
  %500 = vmatpush1.bf16.msra.mxu0 %v360
  %501 = vmatprep.subr.bf16.mxu0 %v363
  %502 = vmatpush1.bf16.msra.mxu0 %v362
  %503 = vmatprep.subr.bf16.mxu0 %v365
  %504 = vmatpush1.bf16.msra.mxu0 %v364
  %505 = vmatprep.subr.bf16.mxu0 %v367
  %506 = vmatpush1.bf16.msra.mxu0 %v366
  %507 = vmatprep.mubr.bf16.mxu0 %v107
  %508 = vmatmul.mubr.bf16.gmra.mrb[0].mxu0 %v106
  %v509 = vpop.f32.mrb[0].mxu0
  %v510 = vadd.f32 %v467, %v509
  %v511 = vpop.f32.mrb[0].mxu0
  %v512 = vadd.f32 %v469, %v511
  %v513 = vpop.f32.mrb[0].mxu0
  %v514 = vadd.f32 %v471, %v513
  %v515 = vpop.f32.mrb[0].mxu0
  %v516 = vadd.f32 %v473, %v515
  %517 = vdwg.mxu0
  %v518 = vld [vmem:[%s2] sm:$0x3]
  %v520 = vlaneseq
  %v521 = vshrl.u32 %v520, 7
  %v522 = vsub.s32 0, %v521
  %v523 = vrot.slane %v518, %v522
  %v524 = vlaneseq
  %v525 = vshrl.u32 %v524, 7
  %v526 = vsub.s32 1, %v525
  %v527 = vrot.slane %v518, %v526
  %v530 = vmul.f32 %v510, %v523
  %v531 = vmul.f32 %v512, %v527
  %v532 = vmul.f32 %v514, %v523
  %v533 = vmul.f32 %v516, %v527
  %v534 = vld [vmem:[%s3] sm:$0x3]
  %v536 = vlaneseq
  %v537 = vshrl.u32 %v536, 7
  %v538 = vsub.s32 0, %v537
  %v539 = vrot.slane %v534, %v538
  %v540 = vlaneseq
  %v541 = vshrl.u32 %v540, 7
  %v542 = vsub.s32 1, %v541
  %v543 = vrot.slane %v534, %v542
  %v546 = vadd.f32 %v530, %v539
  %v547 = vadd.f32 %v531, %v543
  %v548 = vadd.f32 %v532, %v539
  %v549 = vadd.f32 %v533, %v543
  %v550 = vmax.f32 %v546, 0.0
  %v551 = vmax.f32 %v547, 0.0
  %v552 = vmax.f32 %v548, 0.0
  %v553 = vmax.f32 %v549, 0.0
  %v554 = vpack.c.bf16 %v552, %v550
  %v555 = vpack.c.bf16 %v553, %v551
  %v556 = vld [vmem:[%s4] sm:$0xf]
  %v557 = vld [vmem:[%s4 + $0x4] sm:$0xf]
  %v558 = vld [vmem:[%s4 + $0x8] sm:$0xf]
  %v559 = vld [vmem:[%s4 + $0xc] sm:$0xf]
  %v560 = vld [vmem:[%s4 + $0x10] sm:$0xf]
  %v561 = vld [vmem:[%s4 + $0x14] sm:$0xf]
  %v562 = vld [vmem:[%s4 + $0x18] sm:$0xf]
  %v563 = vld [vmem:[%s4 + $0x1c] sm:$0xf]
  %v564 = vld [vmem:[%s4 + $0x20] sm:$0xf]
  %v565 = vld [vmem:[%s4 + $0x24] sm:$0xf]
  %v566 = vld [vmem:[%s4 + $0x28] sm:$0xf]
  %v567 = vld [vmem:[%s4 + $0x2c] sm:$0xf]
  %v568 = vld [vmem:[%s4 + $0x30] sm:$0xf]
  %v569 = vld [vmem:[%s4 + $0x34] sm:$0xf]
  %v570 = vld [vmem:[%s4 + $0x38] sm:$0xf]
  %v571 = vld [vmem:[%s4 + $0x3c] sm:$0xf]
  %v572 = vld [vmem:[%s4 + $0x40] sm:$0xf]
  %v573 = vld [vmem:[%s4 + $0x44] sm:$0xf]
  %v574 = vld [vmem:[%s4 + $0x48] sm:$0xf]
  %v575 = vld [vmem:[%s4 + $0x4c] sm:$0xf]
  %v576 = vld [vmem:[%s4 + $0x50] sm:$0xf]
  %v577 = vld [vmem:[%s4 + $0x54] sm:$0xf]
  %v578 = vld [vmem:[%s4 + $0x58] sm:$0xf]
  %v579 = vld [vmem:[%s4 + $0x5c] sm:$0xf]
  %v580 = vld [vmem:[%s4 + $0x60] sm:$0xf]
  %v581 = vld [vmem:[%s4 + $0x64] sm:$0xf]
  %v582 = vld [vmem:[%s4 + $0x68] sm:$0xf]
  %v583 = vld [vmem:[%s4 + $0x6c] sm:$0xf]
  %v584 = vld [vmem:[%s4 + $0x70] sm:$0xf]
  %v585 = vld [vmem:[%s4 + $0x74] sm:$0xf]
  %v586 = vld [vmem:[%s4 + $0x78] sm:$0xf]
  %v587 = vld [vmem:[%s4 + $0x7c] sm:$0xf]
  %v588 = vld [vmem:[%s5] sm:$0x1]
  %v590 = vlaneseq
  %v591 = vshrl.u32 %v590, 7
  %v592 = vsub.s32 0, %v591
  %v593 = vrot.slane %v588, %v592
  %v627 = vunpack.c.l.b16 %v556
  %v628 = vunpack.c.l.b16 %v557
  %v629 = vunpack.c.l.b16 %v558
  %v630 = vunpack.c.l.b16 %v559
  %v631 = vunpack.c.l.b16 %v560
  %v632 = vunpack.c.l.b16 %v561
  %v633 = vunpack.c.l.b16 %v562
  %v634 = vunpack.c.l.b16 %v563
  %v635 = vunpack.c.l.b16 %v564
  %v636 = vunpack.c.l.b16 %v565
  %v637 = vunpack.c.l.b16 %v566
  %v638 = vunpack.c.l.b16 %v567
  %v639 = vunpack.c.l.b16 %v568
  %v640 = vunpack.c.l.b16 %v569
  %v641 = vunpack.c.l.b16 %v570
  %v642 = vunpack.c.l.b16 %v571
  %v643 = vunpack.c.l.b16 %v572
  %v644 = vunpack.c.l.b16 %v573
  %v645 = vunpack.c.l.b16 %v574
  %v646 = vunpack.c.l.b16 %v575
  %v647 = vunpack.c.l.b16 %v576
  %v648 = vunpack.c.l.b16 %v577
  %v649 = vunpack.c.l.b16 %v578
  %v650 = vunpack.c.l.b16 %v579
  %v651 = vunpack.c.l.b16 %v580
  %v652 = vunpack.c.l.b16 %v581
  %v653 = vunpack.c.l.b16 %v582
  %v654 = vunpack.c.l.b16 %v583
  %v655 = vunpack.c.l.b16 %v584
  %v656 = vunpack.c.l.b16 %v585
  %v657 = vunpack.c.l.b16 %v586
  %v658 = vunpack.c.l.b16 %v587
  %v659 = vpack.c.b16 %v628, %v627
  %v660 = vpack.c.b16 %v630, %v629
  %v661 = vpack.c.b16 %v632, %v631
  %v662 = vpack.c.b16 %v634, %v633
  %v663 = vpack.c.b16 %v636, %v635
  %v664 = vpack.c.b16 %v638, %v637
  %v665 = vpack.c.b16 %v640, %v639
  %v666 = vpack.c.b16 %v642, %v641
  %v667 = vpack.c.b16 %v644, %v643
  %v668 = vpack.c.b16 %v646, %v645
  %v669 = vpack.c.b16 %v648, %v647
  %v670 = vpack.c.b16 %v650, %v649
  %v671 = vpack.c.b16 %v652, %v651
  %v672 = vpack.c.b16 %v654, %v653
  %v673 = vpack.c.b16 %v656, %v655
  %v674 = vpack.c.b16 %v658, %v657
  %691 = vmatprep.subr.bf16.mxu0 0
  %692 = vmatpush1.bf16.msra.mxu0 %v659
  %693 = vmatprep.subr.bf16.mxu0 0
  %694 = vmatpush1.bf16.msra.mxu0 %v660
  %695 = vmatprep.subr.bf16.mxu0 0
  %696 = vmatpush1.bf16.msra.mxu0 %v661
  %697 = vmatprep.subr.bf16.mxu0 0
  %698 = vmatpush1.bf16.msra.mxu0 %v662
  %699 = vmatprep.subr.bf16.mxu0 0
  %700 = vmatpush1.bf16.msra.mxu0 %v663
  %701 = vmatprep.subr.bf16.mxu0 0
  %702 = vmatpush1.bf16.msra.mxu0 %v664
  %703 = vmatprep.subr.bf16.mxu0 0
  %704 = vmatpush1.bf16.msra.mxu0 %v665
  %705 = vmatprep.subr.bf16.mxu0 0
  %706 = vmatpush1.bf16.msra.mxu0 %v666
  %707 = vmatprep.subr.bf16.mxu0 0
  %708 = vmatpush1.bf16.msra.mxu0 %v667
  %709 = vmatprep.subr.bf16.mxu0 0
  %710 = vmatpush1.bf16.msra.mxu0 %v668
  %711 = vmatprep.subr.bf16.mxu0 0
  %712 = vmatpush1.bf16.msra.mxu0 %v669
  %713 = vmatprep.subr.bf16.mxu0 0
  %714 = vmatpush1.bf16.msra.mxu0 %v670
  %715 = vmatprep.subr.bf16.mxu0 0
  %716 = vmatpush1.bf16.msra.mxu0 %v671
  %717 = vmatprep.subr.bf16.mxu0 0
  %718 = vmatpush1.bf16.msra.mxu0 %v672
  %719 = vmatprep.subr.bf16.mxu0 0
  %720 = vmatpush1.bf16.msra.mxu0 %v673
  %721 = vmatprep.subr.bf16.mxu0 0
  %722 = vmatpush1.bf16.msra.mxu0 %v674
  %723 = vmatprep.mubr.bf16.mxu0 %v555
  %724 = vmatmul.mubr.bf16.gmra.mrb[0].mxu0 %v554
  %v725 = vpop.f32.mrb[0].mxu0
  %v726 = vadd.f32 %v593, %v725
  %v727 = vpop.f32.mrb[0].mxu0
  %v728 = vpop.f32.mrb[0].mxu0
  %v729 = vadd.f32 %v593, %v728
  %v730 = vpop.f32.mrb[0].mxu0
  %731 = vdwg.mxu0
  %732 = vst [vmem:[%s6] sm:$0xff] %v726
  %733 = vst [vmem:[%s6 + $0x8] sm:$0xff] %v729
  // Predicated region
  $region26: #{alpha_classifier.3} parent=0 // pred_check
    _
  $region27: #{alpha_classifier.3} parent=0 // pred_check_branch
    %735 = sbr.rel (0) target = $region29
  $region28: #{alpha_classifier.3} parent=0 // pred_region
    _
  $region29: #{alpha_classifier.3} parent=0 // pred_fallthru
    _
  // Predicated region
  $region30: #{alpha_classifier.3} parent=0 // pred_check
    _
  $region31: #{alpha_classifier.3} parent=0 // pred_check_branch
    %737 = sbr.rel (0) target = $region33
  $region32: #{alpha_classifier.3} parent=0 // pred_region
    _
  $region33: #{alpha_classifier.3} parent=0 // pred_fallthru
    _

</llo_original>
